<compile_context>
chip_gen: v6e
topology: v6e:2x2x1
jax: 0.10.0
libtpu: 0.0.40
codegen_flags: <defaults>
</compile_context>

<pallas_src>
import functools

import jax
import jax.numpy as jnp
from jax.experimental import pallas as pl
from jax.experimental.pallas import tpu as pltpu


def _vmem_capacity_bytes():
    """Physical VMEM per core; conservative 64 MiB (v7x) if unknown."""
    try:
        return int(pltpu.get_tpu_info().vmem_capacity_bytes)
    except Exception:
        return 64 << 20


def _pa_kernel(x_ref, w_ref, b_ref, o_ref, *, tile_c, single_cout,
               matmul_dtype, gate_in_f32):
    # x_ref: (C, tile_hw)   w_ref: (tile_c, C) already in matmul dtype
    # b_ref: (tile_c, 1)    o_ref: (tile_c, tile_hw)
    x = x_ref[...]
    if single_cout:
        x_rows = x                                       # gate all channels
    else:
        row0 = pl.multiple_of(pl.program_id(2) * tile_c, tile_c)
        x_rows = x_ref[pl.ds(row0, tile_c), :]           # channels of this C_out tile
    xm = x if x.dtype == matmul_dtype else x.astype(matmul_dtype)
    z = jnp.dot(w_ref[...], xm, preferred_element_type=jnp.float32)
    z = z + b_ref[...].astype(jnp.float32)
    gate = jax.nn.sigmoid(z)                             # f32 sigmoid on the EUP
    if gate_in_f32:
        o_ref[...] = (x_rows.astype(jnp.float32) * gate).astype(o_ref.dtype)
    else:                                                # bf16 epilogue (bf16 inputs)
        o_ref[...] = (x_rows * gate.astype(x_rows.dtype)).astype(o_ref.dtype)


def _maybe_single_buffered(shape, index_map, single_buffer):
    if single_buffer:
        try:   # constant block index -> one resident buffer is enough
            return pl.BlockSpec(shape, index_map, pipeline_mode=pl.Buffered(1))
        except (TypeError, AttributeError):
            pass
    return pl.BlockSpec(shape, index_map)


def pa_forward(x_nchw, weight, bias, *, max_tile_hw=8192):
    """PA forward: x * sigmoid(Conv2d(dim, dim, 1)(x)).

    x_nchw : (N, C, H, W)
    weight : (C, C, 1, 1)  PyTorch Conv2d weight layout [out, in, 1, 1]
    bias   : (C,)
    """
    N, C, H, W = x_nchw.shape
    HW = H * W
    itemsize = jnp.dtype(x_nchw.dtype).itemsize

    x3 = x_nchw.reshape(N, C, HW)                        # free contiguous NCHW view

    # --- matmul dtype: bf16 on the MXU for C >= 128 (fp32 MXU is emulated) ---
    use_bf16 = C >= 128
    w_dtype = jnp.bfloat16 if use_bf16 else jnp.float32
    w_itemsize = jnp.dtype(w_dtype).itemsize
    w_mat = weight[:, :, 0, 0].astype(w_dtype)           # pre-cast once in the wrapper
    b_col = bias.reshape(C, 1).astype(jnp.float32)

    vmem_cap = _vmem_capacity_bytes()                    # 128 MiB v5e/v6e, 64 MiB v7x
    budget = (vmem_cap * 7) // 10                        # working budget w/ headroom

    # --- C_out tiling: keep the resident weight at <= budget/3 (large C, v7x) ---
    tile_c, n_cout = C, 1
    if C >= 1024 and C * C * w_itemsize > budget // 3:
        for cand in range(2, 65):
            tc = C // cand
            if C % cand == 0 and tc % 8 == 0 and 2 * tc * C * w_itemsize <= budget // 3:
                tile_c, n_cout = tc, cand
                break

    # --- lane tile over H*W (the lane-dense axis) ---
    if HW <= 128:
        tile_hw = HW                                     # full extent always allowed
    else:
        w_bytes = (1 if n_cout == 1 else 2) * tile_c * C * w_itemsize
        avail = max(budget - w_bytes, 4 << 20)
        per_col = (2 * C * itemsize                      # x double buffer
                   + 2 * tile_c * itemsize               # out double buffer
                   + (2 * C if (use_bf16 and itemsize != 2) else 0)  # x bf16 copy
                   + 3 * tile_c * 4)                     # z / gate / f32 temporaries
        t = min(int(avail // per_col), max_tile_hw, HW)
        if t >= 512:
            tile_hw = (t // 512) * 512                   # keep DMA rows >= 2 KiB
        else:
            tile_hw = max(128, (t // 128) * 128)

    n_hw = pl.cdiv(HW, tile_hw)                          # boundary tiles are masked

    # --- tiny grids: feed both v7x TensorCores via a C_out split, not tile_hw ---
    while N * n_hw * n_cout < 4 and tile_c > 128 and tile_c % 16 == 0:
        tile_c //= 2
        n_cout *= 2

    single_cout = n_cout == 1
    w_bufs = 1 if single_cout else 2

    # --- VMEM limit: account for intermediates; generation-aware clamp ---
    vmem_need = (2 * C * tile_hw * itemsize              # x double buffer
                 + 2 * tile_c * tile_hw * itemsize       # out double buffer
                 + w_bufs * tile_c * C * w_itemsize      # weight
                 + 2 * tile_c * 4                        # bias
                 + (C * tile_hw * 2 if (use_bf16 and itemsize != 2) else 0)
                 + 3 * tile_c * tile_hw * 4)             # z / gate / f32 temps
    vmem_limit = int(min(vmem_need + (8 << 20), (vmem_cap * 85) // 100))
    vmem_limit = max(vmem_limit, 16 << 20)

    kernel = functools.partial(
        _pa_kernel, tile_c=tile_c, single_cout=single_cout,
        matmul_dtype=w_dtype,
        gate_in_f32=jnp.dtype(x_nchw.dtype).itemsize >= 4)

    def _call(single_buffer_params):
        in_specs = [
            pl.BlockSpec((None, C, tile_hw), lambda n, j, co: (n, 0, j)),
            _maybe_single_buffered((tile_c, C), lambda n, j, co: (co, 0),
                                   single_buffer_params),
            _maybe_single_buffered((tile_c, 1), lambda n, j, co: (co, 0),
                                   single_buffer_params),
        ]
        return pl.pallas_call(
            kernel,
            out_shape=jax.ShapeDtypeStruct((N, C, HW), x3.dtype),
            grid=(N, n_hw, n_cout),                      # C_out innermost: x reused
            in_specs=in_specs,
            out_specs=pl.BlockSpec((None, tile_c, tile_hw),
                                   lambda n, j, co: (n, co, j)),
            compiler_params=pltpu.CompilerParams(
                dimension_semantics=("parallel", "parallel", "parallel"),
                vmem_limit_bytes=vmem_limit,
            ),
            cost_estimate=pl.CostEstimate(
                flops=2 * N * HW * C * C,
                transcendentals=N * HW * C,
                bytes_accessed=2 * N * C * HW * itemsize + C * C * w_itemsize + C * 4,
            ),
        )(x3, w_mat, b_col)

    try:
        out3 = _call(single_cout)
    except Exception:
        if not single_cout:
            raise
        out3 = _call(False)                              # default double-buffering

    return out3.reshape(N, C, H, W)                      # free reshape, still NCHW


if __name__ == "__main__":
    key = jax.random.PRNGKey(0)
    k_x, k_w, k_b, k_x2, k_w2, k_b2 = jax.random.split(key, 6)

    # --- small-shape check (fp32 matmul path), same math as PyTorch PA.forward ---
    N, C, H, W = 2, 4, 16, 16
    x = jax.random.normal(k_x, (N, C, H, W), dtype=jnp.float32)
    weight = 0.1 * jax.random.normal(k_w, (C, C, 1, 1), dtype=jnp.float32)
    bias = 0.1 * jax.random.normal(k_b, (C,), dtype=jnp.float32)

    out = jax.block_until_ready(pa_forward(x, weight, bias))
    z = jnp.einsum("nchw,oc->nohw", x, weight[:, :, 0, 0]) + bias[None, :, None, None]
    ref = x * jax.nn.sigmoid(z)
    assert out.shape == (N, C, H, W)
    assert jnp.allclose(out, ref, atol=1e-5, rtol=1e-5)

    # --- exercise the bf16-MXU path (C >= 128) against a bf16-consistent ref ---
    N2, C2, H2, W2 = 1, 128, 16, 16
    x2 = jax.random.normal(k_x2, (N2, C2, H2, W2), dtype=jnp.float32)
    w2 = 0.05 * jax.random.normal(k_w2, (C2, C2, 1, 1), dtype=jnp.float32)
    b2 = 0.1 * jax.random.normal(k_b2, (C2,), dtype=jnp.float32)

    out2 = jax.block_until_ready(pa_forward(x2, w2, b2))
    z2 = jnp.einsum("nchw,oc->nohw", x2.astype(jnp.bfloat16),
                    w2[:, :, 0, 0].astype(jnp.bfloat16),
                    preferred_element_type=jnp.float32) + b2[None, :, None, None]
    ref2 = x2 * jax.nn.sigmoid(z2)
    assert jnp.allclose(out2, ref2, atol=2e-3, rtol=2e-3)

    print("KERNEL_OK")
</pallas_src>

<mosaic_0001>
module attributes {stable_mosaic.version = 11 : i64} {
  func.func @_pa_kernel(%arg0: i32, %arg1: i32, %arg2: i32, %arg3: memref<1x4x256xf32, #tpu.memory_space<vmem>>, %arg4: memref<4x4xf32, #tpu.memory_space<vmem>>, %arg5: memref<4x1xf32, #tpu.memory_space<vmem>>, %arg6: memref<1x4x256xf32, #tpu.memory_space<vmem>>) attributes {dimension_semantics = [#tpu.dimension_semantics<parallel>, #tpu.dimension_semantics<parallel>, #tpu.dimension_semantics<parallel>], iteration_bounds = array<i64: 2, 1, 1>, scalar_prefetch = 0 : i64, scratch_operands = 0 : i64, tpu.core_type = #tpu.core_type<tc>, window_params = [{transform_indices = @transform_0, window_bounds = array<i64: 1, 4, 256>}, {pipeline_mode = #tpu.pipeline_mode<synchronous>, transform_indices = @transform_1, window_bounds = array<i64: 4, 4>}, {pipeline_mode = #tpu.pipeline_mode<synchronous>, transform_indices = @transform_2, window_bounds = array<i64: 4, 1>}, {transform_indices = @transform_3, window_bounds = array<i64: 1, 4, 256>}]} {
    %c0 = arith.constant 0 : index
    %c0_0 = arith.constant 0 : index
    %c0_1 = arith.constant 0 : index
    %0 = vector.load %arg3[%c0, %c0_0, %c0_1] : memref<1x4x256xf32, #tpu.memory_space<vmem>>, vector<1x4x256xf32>
    %1 = vector.shape_cast %0 : vector<1x4x256xf32> to vector<4x256xf32>
    %c0_2 = arith.constant 0 : index
    %c0_3 = arith.constant 0 : index
    %2 = vector.load %arg4[%c0_2, %c0_3] : memref<4x4xf32, #tpu.memory_space<vmem>>, vector<4x4xf32>
    %cst = arith.constant dense<0.000000e+00> : vector<4x256xf32>
    %3 = tpu.matmul %2, %1, %cst {dimension_numbers = #tpu.dot_dimension_numbers<[1], [0], [0], [1], [0, 0, 1, 1], [], []>} : vector<4x4xf32>, vector<4x256xf32>, vector<4x256xf32> -> vector<4x256xf32>
    %c0_4 = arith.constant 0 : index
    %c0_5 = arith.constant 0 : index
    %4 = vector.load %arg5[%c0_4, %c0_5] : memref<4x1xf32, #tpu.memory_space<vmem>>, vector<4x1xf32>
    %5 = vector.broadcast %4 : vector<4x1xf32> to vector<4x256xf32>
    %6 = arith.addf %3, %5 : vector<4x256xf32>
    %7 = arith.negf %6 : vector<4x256xf32>
    %8 = math.exp %7 : vector<4x256xf32>
    %cst_6 = arith.constant 1.000000e+00 : f32
    %9 = vector.broadcast %cst_6 : f32 to vector<4x256xf32>
    %10 = arith.addf %9, %8 : vector<4x256xf32>
    %11 = arith.divf %9, %10 : vector<4x256xf32>
    %12 = arith.mulf %1, %11 : vector<4x256xf32>
    %c0_7 = arith.constant 0 : index
    %c0_8 = arith.constant 0 : index
    %c0_9 = arith.constant 0 : index
    %13 = vector.load %arg6[%c0_7, %c0_8, %c0_9] : memref<1x4x256xf32, #tpu.memory_space<vmem>>, vector<1x4x256xf32>
    %14 = vector.shape_cast %13 : vector<1x4x256xf32> to vector<4x256xf32>
    %15 = vector.shape_cast %12 : vector<4x256xf32> to vector<1x4x256xf32>
    tpu.vector_store %arg6[%c0_7, %c0_8, %c0_9], %15 {strides = array<i32>} : memref<1x4x256xf32, #tpu.memory_space<vmem>>, vector<1x4x256xf32>,
    return
  }
  func.func @transform_0(%arg0: i32, %arg1: i32, %arg2: i32) -> (i32, i32, i32) {
    %c0_i32 = arith.constant 0 : i32
    %c0_i32_0 = arith.constant 0 : i32
    return %arg0, %c0_i32, %arg1 : i32, i32, i32
  }
  func.func @transform_1(%arg0: i32, %arg1: i32, %arg2: i32) -> (i32, i32) {
    %c0_i32 = arith.constant 0 : i32
    %c0_i32_0 = arith.constant 0 : i32
    return %arg2, %c0_i32 : i32, i32
  }
  func.func @transform_2(%arg0: i32, %arg1: i32, %arg2: i32) -> (i32, i32) {
    %c0_i32 = arith.constant 0 : i32
    %c0_i32_0 = arith.constant 0 : i32
    return %arg2, %c0_i32 : i32, i32
  }
  func.func @transform_3(%arg0: i32, %arg1: i32, %arg2: i32) -> (i32, i32, i32) {
    %c0_i32 = arith.constant 0 : i32
    return %arg0, %arg2, %arg1 : i32, i32, i32
  }
}

module attributes {stable_mosaic.version = 11 : i64} {
  func.func @_pa_kernel(%arg0: i32, %arg1: i32, %arg2: i32, %arg3: memref<1x4x256xf32, #tpu.memory_space<vmem>>, %arg4: memref<4x4xf32, #tpu.memory_space<vmem>>, %arg5: memref<4x1xf32, #tpu.memory_space<vmem>>, %arg6: memref<1x4x256xf32, #tpu.memory_space<vmem>>) attributes {dimension_semantics = [#tpu.dimension_semantics<parallel>, #tpu.dimension_semantics<parallel>, #tpu.dimension_semantics<parallel>], iteration_bounds = array<i64: 2, 1, 1>, scalar_prefetch = 0 : i64, scratch_operands = 0 : i64, tpu.core_type = #tpu.core_type<tc>, window_params = [{transform_indices = @transform_0, window_bounds = array<i64: 1, 4, 256>}, {transform_indices = @transform_1, window_bounds = array<i64: 4, 4>}, {transform_indices = @transform_2, window_bounds = array<i64: 4, 1>}, {transform_indices = @transform_3, window_bounds = array<i64: 1, 4, 256>}]} {
    %c0 = arith.constant 0 : index
    %c0_0 = arith.constant 0 : index
    %c0_1 = arith.constant 0 : index
    %0 = vector.load %arg3[%c0, %c0_0, %c0_1] : memref<1x4x256xf32, #tpu.memory_space<vmem>>, vector<1x4x256xf32>
    %1 = vector.shape_cast %0 : vector<1x4x256xf32> to vector<4x256xf32>
    %c0_2 = arith.constant 0 : index
    %c0_3 = arith.constant 0 : index
    %2 = vector.load %arg4[%c0_2, %c0_3] : memref<4x4xf32, #tpu.memory_space<vmem>>, vector<4x4xf32>
    %cst = arith.constant dense<0.000000e+00> : vector<4x256xf32>
    %3 = tpu.matmul %2, %1, %cst {dimension_numbers = #tpu.dot_dimension_numbers<[1], [0], [0], [1], [0, 0, 1, 1], [], []>} : vector<4x4xf32>, vector<4x256xf32>, vector<4x256xf32> -> vector<4x256xf32>
    %c0_4 = arith.constant 0 : index
    %c0_5 = arith.constant 0 : index
    %4 = vector.load %arg5[%c0_4, %c0_5] : memref<4x1xf32, #tpu.memory_space<vmem>>, vector<4x1xf32>
    %5 = vector.broadcast %4 : vector<4x1xf32> to vector<4x256xf32>
    %6 = arith.addf %3, %5 : vector<4x256xf32>
    %7 = arith.negf %6 : vector<4x256xf32>
    %8 = math.exp %7 : vector<4x256xf32>
    %cst_6 = arith.constant 1.000000e+00 : f32
    %9 = vector.broadcast %cst_6 : f32 to vector<4x256xf32>
    %10 = arith.addf %9, %8 : vector<4x256xf32>
    %11 = arith.divf %9, %10 : vector<4x256xf32>
    %12 = arith.mulf %1, %11 : vector<4x256xf32>
    %c0_7 = arith.constant 0 : index
    %c0_8 = arith.constant 0 : index
    %c0_9 = arith.constant 0 : index
    %13 = vector.load %arg6[%c0_7, %c0_8, %c0_9] : memref<1x4x256xf32, #tpu.memory_space<vmem>>, vector<1x4x256xf32>
    %14 = vector.shape_cast %13 : vector<1x4x256xf32> to vector<4x256xf32>
    %15 = vector.shape_cast %12 : vector<4x256xf32> to vector<1x4x256xf32>
    tpu.vector_store %arg6[%c0_7, %c0_8, %c0_9], %15 {strides = array<i32>} : memref<1x4x256xf32, #tpu.memory_space<vmem>>, vector<1x4x256xf32>,
    return
  }
  func.func @transform_0(%arg0: i32, %arg1: i32, %arg2: i32) -> (i32, i32, i32) {
    %c0_i32 = arith.constant 0 : i32
    %c0_i32_0 = arith.constant 0 : i32
    return %arg0, %c0_i32, %arg1 : i32, i32, i32
  }
  func.func @transform_1(%arg0: i32, %arg1: i32, %arg2: i32) -> (i32, i32) {
    %c0_i32 = arith.constant 0 : i32
    %c0_i32_0 = arith.constant 0 : i32
    return %arg2, %c0_i32 : i32, i32
  }
  func.func @transform_2(%arg0: i32, %arg1: i32, %arg2: i32) -> (i32, i32) {
    %c0_i32 = arith.constant 0 : i32
    %c0_i32_0 = arith.constant 0 : i32
    return %arg2, %c0_i32 : i32, i32
  }
  func.func @transform_3(%arg0: i32, %arg1: i32, %arg2: i32) -> (i32, i32, i32) {
    %c0_i32 = arith.constant 0 : i32
    return %arg0, %arg2, %arg1 : i32, i32, i32
  }
}

</mosaic_0001>

<llo_original>
// kernel: tpu_custom_call.1
$region0: #{tpu_custom_call.1}
  #allocation0 [shape = 'u32[]', space=smem, size = 0x4, offset = 0x4, fixed_abs, tag = 'smem constant byte address 0x4 - core index']
  #allocation1 [shape = 'u32[144,128]{1,0:T(1,128)}', space=vmem, size = 0x12000, scoped, tag = 'internal scratch']
  %s0 = inlined_call_operand.hbm [shape: f32[2,4,256], index: 0, kind: input, shape index: {}]
  %s1 = inlined_call_operand.vmem [shape: f32[4,4], index: 1, kind: input, shape index: {}]
  %s2 = inlined_call_operand.vmem [shape: f32[4,1], index: 2, kind: input, shape index: {}]
  %s3 = inlined_call_operand.hbm [shape: f32[2,4,256], index: 3, kind: output, shape index: {}]
  %s4 = sld [smem:[#allocation0]]
  $region49: #{tpu_custom_call.1} parent=0
    _
  %s6 = ssub.s32 1, %s4
  %s7 = scalar_select 0, %s6, %s4
  $region1: #{tpu_custom_call.1} parent=0
    #allocation2 [shape = 'u8[8192]{0}', space=vmem, size = 0x2000, scoped, tag = 'input window, operand 0']
    #allocation3 [shape = 's32[2]{0}', space=sflag, size = 0x8, scoped, tag = 'scoped memory for tpu_custom_call.1']
    #allocation4 [shape = 's32[2]{0}', space=sflag, size = 0x8, scoped, tag = 'scoped memory for tpu_custom_call.1']
    #allocation5 [shape = 'u8[8192]{0}', space=vmem, size = 0x2000, scoped, tag = 'output window, operand 0']
    %8 = vsyncpa [#allocation3], 0
    %s9 = scalar_lea.sflag [#allocation3], 1
    %10 = vsyncpa %s9, 0
    %11 = vsyncpa [#allocation4], 0
    %s12 = scalar_lea.sflag [#allocation4], 1
    %13 = vsyncpa %s12, 0
    loop: start=0, step=1, limit=4
    $region2: #{tpu_custom_call.1} parent=1 // loop_pre_header
      _
    $region3: #{tpu_custom_call.1} parent=1 // loop_header
      %s15 = sphi 0, %s19
      %p16 = scmp.ge.s32.totalorder %s15, 4
      %s22 = sphi 0, %s41
      %s23 = sphi 0, %s37
      %s24 = sphi 0, %s33
      %s25 = sphi 0, %s22
      %s26 = sphi 0, %s23
      %s27 = sphi 0, %s24
      %s28 = sphi 0, %s25
      %s29 = sphi 0, %s26
      %s30 = sphi 0, %s27
      %s46 = sphi 0, %s48
      %s49 = sphi 0, %s46
      %s50 = sphi 0, %s49
      %s66 = sphi 0, %s50
      %s72 = sphi 0, %s74
      %s75 = sphi 0, %s72
      %s76 = sphi 0, %s75
      %s92 = sphi 0, %s76
      %s98 = sphi 0, %s100
      %s101 = sphi 0, %s98
      %s102 = sphi 0, %s101
      %s118 = sphi 0, %s102
      %s128 = sphi 0, %s130
      %s131 = sphi 0, %s128
      %s132 = sphi 0, %s131
      %s148 = sphi 0, %s132
    $region4: #{tpu_custom_call.1} parent=1 // loop_header_branch
      %18 = sbr.rel (%p16) target = $region8
    $region5: #{tpu_custom_call.1} parent=1 // loop_body
      %s20 = ssub.s32 %s15, 1
      %s21 = ssub.s32 %s15, 2
      %s31 = sadd.s32 1, %s24
      %p32 = scmp.ge.s32.totalorder %s31, 1
      %s33 = scalar_select %p32, 0, %s31
      %s34 = sadd.s32 1, %s23
      %s35 = scalar_select %p32, %s34, %s23
      %p36 = scmp.ge.s32.totalorder %s35, 1
      %s37 = scalar_select %p36, 0, %s35
      %s38 = sadd.s32 1, %s22
      %s39 = scalar_select %p36, %s38, %s22
      %p40 = scmp.ge.s32.totalorder %s39, 2
      %s41 = scalar_select %p40, 0, %s39
      %s42 = ssub.s32 %s22, %s41
      %s43 = ssub.s32 %s23, %s37
      %s44 = sor.u32 %s42, %s43
      %p45 = scmp.eq.s32.totalorder %s44, 0
      %s47 = sadd.s32 %s46, 1
      %s48 = scalar_select %p45, %s46, %s47
      %p51 = pneg %p45
      %p52 = scmp.eq.s32.totalorder %s15, 1
      %p53 = por %p51, %p52
      %p54 = scmp.ne.s32.totalorder %s46, %s49
      %p55 = scmp.eq.s32.totalorder %s15, 0
      %p56 = por %p54, %p55
      %p57 = scmp.ne.s32.totalorder %s46, %s49
      %p58 = scmp.eq.s32.totalorder %s20, 1
      %p59 = por %p57, %p58
      %p60 = scmp.ne.s32.totalorder %s49, %s50
      %p61 = scmp.eq.s32.totalorder %s20, 0
      %p62 = por %p60, %p61
      %p63 = scmp.ne.s32.totalorder %s49, %s50
      %p64 = scmp.eq.s32.totalorder %s21, 1
      %p65 = por %p63, %p64
      %p67 = scmp.ne.s32.totalorder %s50, %s66
      %p68 = scmp.eq.s32.totalorder %s21, 0
      %p69 = por %p67, %p68
      %s70 = ssub.s32 %s24, %s33
      %p71 = scmp.eq.s32.totalorder %s70, 0
      %s73 = sadd.s32 %s72, 1
      %s74 = scalar_select %p71, %s72, %s73
      %p77 = pneg %p71
      %p78 = scmp.eq.s32.totalorder %s15, 1
      %p79 = por %p77, %p78
      %p80 = scmp.ne.s32.totalorder %s72, %s75
      %p81 = scmp.eq.s32.totalorder %s15, 0
      %p82 = por %p80, %p81
      %p83 = scmp.ne.s32.totalorder %s72, %s75
      %p84 = scmp.eq.s32.totalorder %s20, 1
      %p85 = por %p83, %p84
      %p86 = scmp.ne.s32.totalorder %s75, %s76
      %p87 = scmp.eq.s32.totalorder %s20, 0
      %p88 = por %p86, %p87
      %p89 = scmp.ne.s32.totalorder %s75, %s76
      %p90 = scmp.eq.s32.totalorder %s21, 1
      %p91 = por %p89, %p90
      %p93 = scmp.ne.s32.totalorder %s76, %s92
      %p94 = scmp.eq.s32.totalorder %s21, 0
      %p95 = por %p93, %p94
      %s96 = ssub.s32 %s24, %s33
      %p97 = scmp.eq.s32.totalorder %s96, 0
      %s99 = sadd.s32 %s98, 1
      %s100 = scalar_select %p97, %s98, %s99
      %p103 = pneg %p97
      %p104 = scmp.eq.s32.totalorder %s15, 1
      %p105 = por %p103, %p104
      %p106 = scmp.ne.s32.totalorder %s98, %s101
      %p107 = scmp.eq.s32.totalorder %s15, 0
      %p108 = por %p106, %p107
      %p109 = scmp.ne.s32.totalorder %s98, %s101
      %p110 = scmp.eq.s32.totalorder %s20, 1
      %p111 = por %p109, %p110
      %p112 = scmp.ne.s32.totalorder %s101, %s102
      %p113 = scmp.eq.s32.totalorder %s20, 0
      %p114 = por %p112, %p113
      %p115 = scmp.ne.s32.totalorder %s101, %s102
      %p116 = scmp.eq.s32.totalorder %s21, 1
      %p117 = por %p115, %p116
      %p119 = scmp.ne.s32.totalorder %s102, %s118
      %p120 = scmp.eq.s32.totalorder %s21, 0
      %p121 = por %p119, %p120
      %s122 = ssub.s32 %s22, %s41
      %s123 = ssub.s32 %s24, %s33
      %s124 = sor.u32 %s122, %s123
      %s125 = ssub.s32 %s23, %s37
      %s126 = sor.u32 %s124, %s125
      %p127 = scmp.eq.s32.totalorder %s126, 0
      %s129 = sadd.s32 %s128, 1
      %s130 = scalar_select %p127, %s128, %s129
      %p133 = pneg %p127
      %p134 = scmp.eq.s32.totalorder %s15, 1
      %p135 = por %p133, %p134
      %p136 = scmp.ne.s32.totalorder %s128, %s131
      %p137 = scmp.eq.s32.totalorder %s15, 0
      %p138 = por %p136, %p137
      %p139 = scmp.ne.s32.totalorder %s128, %s131
      %p140 = scmp.eq.s32.totalorder %s20, 1
      %p141 = por %p139, %p140
      %p142 = scmp.ne.s32.totalorder %s131, %s132
      %p143 = scmp.eq.s32.totalorder %s20, 0
      %p144 = por %p142, %p143
      %p145 = scmp.ne.s32.totalorder %s131, %s132
      %p146 = scmp.eq.s32.totalorder %s21, 1
      %p147 = por %p145, %p146
      %p149 = scmp.ne.s32.totalorder %s132, %s148
      %p150 = scmp.eq.s32.totalorder %s21, 0
      %p151 = por %p149, %p150
      %p152 = scmp.le.s32.totalorder 1, %s15
      %p153 = scmp.lt.s32.totalorder %s15, 3
      %p154 = pnand %p152, %p153
      %p155 = pneg %p154
      // Predicated region
      $region9: #{tpu_custom_call.1} parent=5 // pred_check
        _
      $region10: #{tpu_custom_call.1} parent=5 // pred_check_branch
        %157 = sbr.rel (%p154) target = $region12
      $region11: #{tpu_custom_call.1} parent=5 // pred_region
        %s158 = ssub.s32 %s15, 1
        // Predicated region
        $region13: #{tpu_custom_call.1} parent=11 // pred_check
          %p159 = pneg %p88
        $region14: #{tpu_custom_call.1} parent=11 // pred_check_branch
          %161 = sbr.rel (%p159) target = $region16
        $region15: #{tpu_custom_call.1} parent=11 // pred_region
          %p162 = scmp.lt.s32.totalorder %s27, 0
          %s163 = scalar_select %p162, %s27, 0
          %s164 = smul.addr %s163, 4
          %s165 = scalar_lea.vmem %s1, %s164
        $region16: #{tpu_custom_call.1} parent=11 // pred_fallthru
          _
        // Predicated region
        $region17: #{tpu_custom_call.1} parent=11 // pred_check
          %p166 = pneg %p114
        $region18: #{tpu_custom_call.1} parent=11 // pred_check_branch
          %168 = sbr.rel (%p166) target = $region20
        $region19: #{tpu_custom_call.1} parent=11 // pred_region
          %p169 = scmp.lt.s32.totalorder %s27, 0
          %s170 = scalar_select %p169, %s27, 0
          %s171 = smul.addr %s170, 4
          %s172 = scalar_lea.vmem %s2, %s171
        $region20: #{tpu_custom_call.1} parent=11 // pred_fallthru
          _
      $region12: #{tpu_custom_call.1} parent=5 // pred_fallthru
        _
      %p173 = scmp.lt.s32.totalorder %s15, 2
      // Predicated region
      $region21: #{tpu_custom_call.1} parent=5 // pred_check
        %p174 = pneg %p173
      $region22: #{tpu_custom_call.1} parent=5 // pred_check_branch
        %176 = sbr.rel (%p174) target = $region24
      $region23: #{tpu_custom_call.1} parent=5 // pred_region
        // Predicated region
        $region25: #{tpu_custom_call.1} parent=23 // pred_check
          %p177 = pneg %p56
        $region26: #{tpu_custom_call.1} parent=23 // pred_check_branch
          %179 = sbr.rel (%p177) target = $region28
        $region27: #{tpu_custom_call.1} parent=23 // pred_region
          %s180 = sand.u32 %s46, 1
          %s181 = scalar_lea.sflag [#allocation3], %s180
          %s182 = sand.u32 %s46, 1
          %s183 = smul.addr %s182, 8
          %s184 = scalar_lea.vmem [#allocation2], %s183
          %s185 = smul.u32 2, %s23
          %s187 = ssub.s32 128, 128
          %188 = vsyncadd %s181, %s187
          %s189 = smul.addr %s22, 2
          %s190 = sadd.s32 %s185, %s189
          %s191 = smul.addr %s190, 64
          %s192 = scalar_lea.hbm %s0, %s191
          %s194 = sshll.u32 %s184, 4
          %s195 = int_to_ptr.vmem [resolvable:$true] %s194
          %197 = dma.hbm_to_vmem [thread:$0]  %s192, 128, %s195, %s181
        $region28: #{tpu_custom_call.1} parent=23 // pred_fallthru
          _
      $region24: #{tpu_custom_call.1} parent=5 // pred_fallthru
        _
      %p198 = scmp.le.s32.totalorder 1, %s15
      %p199 = scmp.lt.s32.totalorder %s15, 3
      %p200 = pnand %p198, %p199
      %p201 = pneg %p200
      // Predicated region
      $region29: #{tpu_custom_call.1} parent=5 // pred_check
        _
      $region30: #{tpu_custom_call.1} parent=5 // pred_check_branch
        %203 = sbr.rel (%p200) target = $region32
      $region31: #{tpu_custom_call.1} parent=5 // pred_region
        %s204 = ssub.s32 %s15, 1
        %s205 = sand.u32 %s49, 1
        %s206 = scalar_lea.sflag [#allocation3], %s205
        %s207 = sand.u32 %s49, 1
        %s208 = smul.addr %s207, 8
        %s209 = scalar_lea.vmem [#allocation2], %s208
        // Predicated region
        $region33: #{tpu_custom_call.1} parent=31 // pred_check
          %p210 = pneg %p62
        $region34: #{tpu_custom_call.1} parent=31 // pred_check_branch
          %212 = sbr.rel (%p210) target = $region36
        $region35: #{tpu_custom_call.1} parent=31 // pred_region
          %213 = dma.done %s206, 128
        $region36: #{tpu_custom_call.1} parent=31 // pred_fallthru
          _
        %s214 = sand.u32 %s49, 1
        %s215 = scalar_lea.sflag [#allocation3], %s214
        %s216 = sand.u32 %s49, 1
        %s217 = smul.addr %s216, 8
        %s218 = scalar_lea.vmem [#allocation2], %s217
        %p219 = pneg %p62
        %p220 = pneg %p59
        %p221 = scmp.lt.s32.totalorder %s27, 0
        %s222 = scalar_select %p221, %s27, 0
        %s223 = smul.addr %s222, 4
        %s224 = scalar_lea.vmem %s1, %s223
        %p225 = pneg %p88
        %p226 = pneg %p85
        %p227 = scmp.lt.s32.totalorder %s27, 0
        %s228 = scalar_select %p227, %s27, 0
        %s229 = smul.addr %s228, 4
        %s230 = scalar_lea.vmem %s2, %s229
        %p231 = pneg %p114
        %p232 = pneg %p111
        %p233 = pneg %p144
        %p234 = pneg %p141
        %s235 = sand.u32 %s131, 1
        %s236 = scalar_lea.sflag [#allocation4], %s235
        %s237 = sand.u32 %s131, 1
        %s238 = smul.addr %s237, 8
        %s239 = scalar_lea.vmem [#allocation5], %s238
        %s240 = smul.u32 2, %s26
        %p241 = scmp.lt.s32.totalorder %s27, 0
        %s242 = scalar_select %p241, %s27, 0
        %s243 = smul.addr %s242, 4
        %s244 = scalar_lea.vmem %s1, %s243
        %p245 = scmp.lt.s32.totalorder %s27, 0
        %s246 = scalar_select %p245, %s27, 0
        %s247 = smul.addr %s246, 4
        %s248 = scalar_lea.vmem %s2, %s247
        %s249 = smul.u32 2, %s26
        %v250 = vld [vmem:[%s209] sm:$0xff]
        %v251 = vld [vmem:[%s244] sm:$0xf]
        %v252 = vld [vmem:[%s248] sm:$0xf]
        %254 = vset.pattern.permute.xlu0 0
        %255 = vperm.xlu0 %254, %v252
        %v256 = vpop.permute.xlu0 %255
        %v259 = vcombine.high %v250, %v250
        %vm260 = vcmask 31744
        %v262 = vsel %vm260, %v251, 0
        %vm264 = vcmask 1043456
        %v265 = vsel %vm264, %v250, 0
        %v267 = vsel %vm264, %v259, 0
        %269 = vmatprep.subr.mxu0 0.0
        %270 = vmatpush1.msra.mxu0 0.0
        %271 = vmatprep.subr.mxu0 0.0
        %272 = vmatpush1.msra.mxu0 0.0
        %273 = vmatprep.subr.mxu0 0.0
        %274 = vmatpush1.msra.mxu0 0.0
        %275 = vmatprep.subr.mxu0 0.0
        %276 = vmatpush1.msra.mxu0 0.0
        %277 = vmatprep.subr.mxu0 0.0
        %278 = vmatpush1.msra.mxu0 0.0
        %279 = vmatprep.subr.mxu0 0.0
        %280 = vmatpush1.msra.mxu0 0.0
        %281 = vmatprep.subr.mxu0 0.0
        %282 = vmatpush1.msra.mxu0 0.0
        %283 = vmatprep.subr.mxu0 0.0
        %284 = vmatpush1.msra.mxu0 0.0
        %285 = vmatprep.subr.mxu0 0.0
        %286 = vmatpush1.msra.mxu0 0.0
        %287 = vmatprep.subr.mxu0 0.0
        %288 = vmatpush1.msra.mxu0 0.0
        %289 = vmatprep.subr.mxu0 0.0
        %290 = vmatpush1.msra.mxu0 0.0
        %291 = vmatprep.subr.mxu0 0.0
        %292 = vmatpush1.msra.mxu0 0.0
        %293 = vmatprep.subr.mxu0 0.0
        %294 = vmatpush1.msra.mxu0 0.0
        %295 = vmatprep.subr.mxu0 0.0
        %296 = vmatpush1.msra.mxu0 0.0
        %297 = vmatprep.subr.mxu0 0.0
        %298 = vmatpush1.msra.mxu0 0.0
        %299 = vmatprep.subr.mxu0 %v267
        %300 = vmatpush1.msra.mxu0 %v265
        %301 = vmatprep.subr.mxu0 0.0
        %302 = vmatpush2.msra.mxu0 0.0
        %303 = vmatprep.subr.mxu0 0.0
        %304 = vmatpush2.msra.mxu0 0.0
        %305 = vmatprep.subr.mxu0 0.0
        %306 = vmatpush2.msra.mxu0 0.0
        %307 = vmatprep.subr.mxu0 0.0
        %308 = vmatpush2.msra.mxu0 0.0
        %309 = vmatprep.subr.mxu0 0.0
        %310 = vmatpush2.msra.mxu0 0.0
        %311 = vmatprep.subr.mxu0 0.0
        %312 = vmatpush2.msra.mxu0 0.0
        %313 = vmatprep.subr.mxu0 0.0
        %314 = vmatpush2.msra.mxu0 0.0
        %315 = vmatprep.subr.mxu0 0.0
        %316 = vmatpush2.msra.mxu0 0.0
        %317 = vmatprep.subr.mxu0 0.0
        %318 = vmatpush2.msra.mxu0 0.0
        %319 = vmatprep.subr.mxu0 0.0
        %320 = vmatpush2.msra.mxu0 0.0
        %321 = vmatprep.subr.mxu0 0.0
        %322 = vmatpush2.msra.mxu0 0.0
        %323 = vmatprep.subr.mxu0 0.0
        %324 = vmatpush2.msra.mxu0 0.0
        %325 = vmatprep.subr.mxu0 0.0
        %326 = vmatpush2.msra.mxu0 0.0
        %327 = vmatprep.subr.mxu0 0.0
        %328 = vmatpush2.msra.mxu0 0.0
        %329 = vmatprep.subr.mxu0 0.0
        %330 = vmatpush2.msra.mxu0 0.0
        %331 = vmatprep.subr.mxu0 0.0
        %332 = vmatpush2.msra.mxu0 0.0
        %333 = vmatprep.mubr.f32.mxu0 0.0
        %334 = vmatmul.mubr.f32.gmra.mxu0 %v262
        %v335 = vpop.f32.mrf.mxu0
        %v336 = vadd.f32 %v256, %v335
        %v337 = vpop.f32.mrf.mxu0
        %v338 = vadd.f32 %v256, %v337
        %339 = vdwg.mxu0
        %v340 = vxor.u32 %v336, 2147483648
        %v341 = vxor.u32 %v338, 2147483648
        %v342 = vmul.f32 %v340, 1.442695
        %v343 = vpow.pop %v342
        %v344 = vmul.f32 %v341, 1.442695
        %v345 = vpow.pop %v344
        %v346 = vadd.f32 %v343, 1.0
        %v347 = vadd.f32 %v345, 1.0
        %v348 = vrcp.pop %v346
        %v349 = vmul.f32 1.0, %v348
        %v350 = vrcp.pop %v347
        %v351 = vmul.f32 1.0, %v350
        %v354 = vcombine.low %v349, %v351
        %v356 = vmul.f32 %v250, %v354
        %357 = vst [vmem:[%s239] sm:$0xff] %v356
        %s358 = sand.u32 %s131, 1
        %s359 = scalar_lea.sflag [#allocation4], %s358
        %s360 = sand.u32 %s131, 1
        %s361 = smul.addr %s360, 8
        %s362 = scalar_lea.vmem [#allocation5], %s361
        // Predicated region
        $region37: #{tpu_custom_call.1} parent=31 // pred_check
          %p363 = pneg %p141
        $region38: #{tpu_custom_call.1} parent=31 // pred_check_branch
          %365 = sbr.rel (%p363) target = $region40
        $region39: #{tpu_custom_call.1} parent=31 // pred_region
          %s366 = smul.u32 2, %s26
          %s368 = ssub.s32 128, 128
          %369 = vsyncadd %s359, %s368
          %s370 = smul.addr %s27, 2
          %s371 = sadd.s32 %s366, %s370
          %s372 = smul.addr %s25, 2
          %s373 = sadd.s32 %s371, %s372
          %s374 = smul.addr %s373, 64
          %s375 = scalar_lea.hbm %s3, %s374
          %s377 = sshll.u32 %s362, 4
          %s378 = int_to_ptr.vmem [resolvable:$true] %s377
          %380 = dma.vmem_to_hbm [thread:$0]  %s378, 128, %s375, %s359
        $region40: #{tpu_custom_call.1} parent=31 // pred_fallthru
          _
      $region32: #{tpu_custom_call.1} parent=5 // pred_fallthru
        _
      %p381 = scmp.le.s32.totalorder 2, %s15
      // Predicated region
      $region41: #{tpu_custom_call.1} parent=5 // pred_check
        %p382 = pneg %p381
      $region42: #{tpu_custom_call.1} parent=5 // pred_check_branch
        %384 = sbr.rel (%p382) target = $region44
      $region43: #{tpu_custom_call.1} parent=5 // pred_region
        %s385 = ssub.s32 %s15, 2
        // Predicated region
        $region45: #{tpu_custom_call.1} parent=43 // pred_check
          %p386 = pneg %p147
        $region46: #{tpu_custom_call.1} parent=43 // pred_check_branch
          %388 = sbr.rel (%p386) target = $region48
        $region47: #{tpu_custom_call.1} parent=43 // pred_region
          %s389 = sand.u32 %s132, 1
          %s390 = scalar_lea.sflag [#allocation4], %s389
          %s391 = sand.u32 %s132, 1
          %s392 = smul.addr %s391, 8
          %s393 = scalar_lea.vmem [#allocation5], %s392
          %394 = dma.done %s390, 128
        $region48: #{tpu_custom_call.1} parent=43 // pred_fallthru
          _
      $region44: #{tpu_custom_call.1} parent=5 // pred_fallthru
        _
    $region6: #{tpu_custom_call.1} parent=1 // loop_footer
      %s19 = sadd.s32 1, %s15
    $region7: #{tpu_custom_call.1} parent=1 // loop_footer_branch
      %14 = sbr.rel target = $region3
    $region8: #{tpu_custom_call.1} parent=1 // loop_exit
      _
    %395 = vsyncpa [#allocation3], 1
    %s396 = scalar_lea.sflag [#allocation3], 1
    %397 = vsyncpa %s396, 1
    %398 = vsyncpa [#allocation4], 1
    %s399 = scalar_lea.sflag [#allocation4], 1
    %400 = vsyncpa %s399, 1

// kernel: tpu_custom_call.1
$region0: #{tpu_custom_call.1}
  #allocation0 [shape = 'u32[]', space=smem, size = 0x4, offset = 0x4, fixed_abs, tag = 'smem constant byte address 0x4 - core index']
  #allocation1 [shape = 'u32[144,128]{1,0:T(1,128)}', space=vmem, size = 0x12000, scoped, tag = 'internal scratch']
  %s0 = inlined_call_operand.hbm [shape: f32[2,4,256], index: 0, kind: input, shape index: {}]
  %s1 = inlined_call_operand.vmem [shape: f32[4,4], index: 1, kind: input, shape index: {}]
  %s2 = inlined_call_operand.vmem [shape: f32[4,1], index: 2, kind: input, shape index: {}]
  %s3 = inlined_call_operand.hbm [shape: f32[2,4,256], index: 3, kind: output, shape index: {}]
  %s4 = sld [smem:[#allocation0]]
  $region49: #{tpu_custom_call.1} parent=0
    _
  %s6 = ssub.s32 1, %s4
  %s7 = scalar_select 0, %s6, %s4
  $region1: #{tpu_custom_call.1} parent=0
    #allocation2 [shape = 'u8[8192]{0}', space=vmem, size = 0x2000, scoped, tag = 'input window, operand 0']
    #allocation3 [shape = 's32[2]{0}', space=sflag, size = 0x8, scoped, tag = 'scoped memory for tpu_custom_call.1']
    #allocation4 [shape = 's32[2]{0}', space=sflag, size = 0x8, scoped, tag = 'scoped memory for tpu_custom_call.1']
    #allocation5 [shape = 'u8[8192]{0}', space=vmem, size = 0x2000, scoped, tag = 'output window, operand 0']
    %8 = vsyncpa [#allocation3], 0
    %s9 = scalar_lea.sflag [#allocation3], 1
    %10 = vsyncpa %s9, 0
    %11 = vsyncpa [#allocation4], 0
    %s12 = scalar_lea.sflag [#allocation4], 1
    %13 = vsyncpa %s12, 0
    loop: start=0, step=1, limit=4
    $region2: #{tpu_custom_call.1} parent=1 // loop_pre_header
      _
    $region3: #{tpu_custom_call.1} parent=1 // loop_header
      %s15 = sphi 0, %s19
      %p16 = scmp.ge.s32.totalorder %s15, 4
      %s22 = sphi 0, %s41
      %s23 = sphi 0, %s37
      %s24 = sphi 0, %s33
      %s25 = sphi 0, %s22
      %s26 = sphi 0, %s23
      %s27 = sphi 0, %s24
      %s28 = sphi 0, %s25
      %s29 = sphi 0, %s26
      %s30 = sphi 0, %s27
      %s46 = sphi 0, %s48
      %s49 = sphi 0, %s46
      %s50 = sphi 0, %s49
      %s66 = sphi 0, %s50
      %s72 = sphi 0, %s74
      %s75 = sphi 0, %s72
      %s76 = sphi 0, %s75
      %s92 = sphi 0, %s76
      %s98 = sphi 0, %s100
      %s101 = sphi 0, %s98
      %s102 = sphi 0, %s101
      %s118 = sphi 0, %s102
      %s128 = sphi 0, %s130
      %s131 = sphi 0, %s128
      %s132 = sphi 0, %s131
      %s148 = sphi 0, %s132
    $region4: #{tpu_custom_call.1} parent=1 // loop_header_branch
      %18 = sbr.rel (%p16) target = $region8
    $region5: #{tpu_custom_call.1} parent=1 // loop_body
      %s20 = ssub.s32 %s15, 1
      %s21 = ssub.s32 %s15, 2
      %s31 = sadd.s32 1, %s24
      %p32 = scmp.ge.s32.totalorder %s31, 1
      %s33 = scalar_select %p32, 0, %s31
      %s34 = sadd.s32 1, %s23
      %s35 = scalar_select %p32, %s34, %s23
      %p36 = scmp.ge.s32.totalorder %s35, 1
      %s37 = scalar_select %p36, 0, %s35
      %s38 = sadd.s32 1, %s22
      %s39 = scalar_select %p36, %s38, %s22
      %p40 = scmp.ge.s32.totalorder %s39, 2
      %s41 = scalar_select %p40, 0, %s39
      %s42 = ssub.s32 %s22, %s41
      %s43 = ssub.s32 %s23, %s37
      %s44 = sor.u32 %s42, %s43
      %p45 = scmp.eq.s32.totalorder %s44, 0
      %s47 = sadd.s32 %s46, 1
      %s48 = scalar_select %p45, %s46, %s47
      %p51 = pneg %p45
      %p52 = scmp.eq.s32.totalorder %s15, 1
      %p53 = por %p51, %p52
      %p54 = scmp.ne.s32.totalorder %s46, %s49
      %p55 = scmp.eq.s32.totalorder %s15, 0
      %p56 = por %p54, %p55
      %p57 = scmp.ne.s32.totalorder %s46, %s49
      %p58 = scmp.eq.s32.totalorder %s20, 1
      %p59 = por %p57, %p58
      %p60 = scmp.ne.s32.totalorder %s49, %s50
      %p61 = scmp.eq.s32.totalorder %s20, 0
      %p62 = por %p60, %p61
      %p63 = scmp.ne.s32.totalorder %s49, %s50
      %p64 = scmp.eq.s32.totalorder %s21, 1
      %p65 = por %p63, %p64
      %p67 = scmp.ne.s32.totalorder %s50, %s66
      %p68 = scmp.eq.s32.totalorder %s21, 0
      %p69 = por %p67, %p68
      %s70 = ssub.s32 %s24, %s33
      %p71 = scmp.eq.s32.totalorder %s70, 0
      %s73 = sadd.s32 %s72, 1
      %s74 = scalar_select %p71, %s72, %s73
      %p77 = pneg %p71
      %p78 = scmp.eq.s32.totalorder %s15, 1
      %p79 = por %p77, %p78
      %p80 = scmp.ne.s32.totalorder %s72, %s75
      %p81 = scmp.eq.s32.totalorder %s15, 0
      %p82 = por %p80, %p81
      %p83 = scmp.ne.s32.totalorder %s72, %s75
      %p84 = scmp.eq.s32.totalorder %s20, 1
      %p85 = por %p83, %p84
      %p86 = scmp.ne.s32.totalorder %s75, %s76
      %p87 = scmp.eq.s32.totalorder %s20, 0
      %p88 = por %p86, %p87
      %p89 = scmp.ne.s32.totalorder %s75, %s76
      %p90 = scmp.eq.s32.totalorder %s21, 1
      %p91 = por %p89, %p90
      %p93 = scmp.ne.s32.totalorder %s76, %s92
      %p94 = scmp.eq.s32.totalorder %s21, 0
      %p95 = por %p93, %p94
      %s96 = ssub.s32 %s24, %s33
      %p97 = scmp.eq.s32.totalorder %s96, 0
      %s99 = sadd.s32 %s98, 1
      %s100 = scalar_select %p97, %s98, %s99
      %p103 = pneg %p97
      %p104 = scmp.eq.s32.totalorder %s15, 1
      %p105 = por %p103, %p104
      %p106 = scmp.ne.s32.totalorder %s98, %s101
      %p107 = scmp.eq.s32.totalorder %s15, 0
      %p108 = por %p106, %p107
      %p109 = scmp.ne.s32.totalorder %s98, %s101
      %p110 = scmp.eq.s32.totalorder %s20, 1
      %p111 = por %p109, %p110
      %p112 = scmp.ne.s32.totalorder %s101, %s102
      %p113 = scmp.eq.s32.totalorder %s20, 0
      %p114 = por %p112, %p113
      %p115 = scmp.ne.s32.totalorder %s101, %s102
      %p116 = scmp.eq.s32.totalorder %s21, 1
      %p117 = por %p115, %p116
      %p119 = scmp.ne.s32.totalorder %s102, %s118
      %p120 = scmp.eq.s32.totalorder %s21, 0
      %p121 = por %p119, %p120
      %s122 = ssub.s32 %s22, %s41
      %s123 = ssub.s32 %s24, %s33
      %s124 = sor.u32 %s122, %s123
      %s125 = ssub.s32 %s23, %s37
      %s126 = sor.u32 %s124, %s125
      %p127 = scmp.eq.s32.totalorder %s126, 0
      %s129 = sadd.s32 %s128, 1
      %s130 = scalar_select %p127, %s128, %s129
      %p133 = pneg %p127
      %p134 = scmp.eq.s32.totalorder %s15, 1
      %p135 = por %p133, %p134
      %p136 = scmp.ne.s32.totalorder %s128, %s131
      %p137 = scmp.eq.s32.totalorder %s15, 0
      %p138 = por %p136, %p137
      %p139 = scmp.ne.s32.totalorder %s128, %s131
      %p140 = scmp.eq.s32.totalorder %s20, 1
      %p141 = por %p139, %p140
      %p142 = scmp.ne.s32.totalorder %s131, %s132
      %p143 = scmp.eq.s32.totalorder %s20, 0
      %p144 = por %p142, %p143
      %p145 = scmp.ne.s32.totalorder %s131, %s132
      %p146 = scmp.eq.s32.totalorder %s21, 1
      %p147 = por %p145, %p146
      %p149 = scmp.ne.s32.totalorder %s132, %s148
      %p150 = scmp.eq.s32.totalorder %s21, 0
      %p151 = por %p149, %p150
      %p152 = scmp.le.s32.totalorder 1, %s15
      %p153 = scmp.lt.s32.totalorder %s15, 3
      %p154 = pnand %p152, %p153
      %p155 = pneg %p154
      // Predicated region
      $region9: #{tpu_custom_call.1} parent=5 // pred_check
        _
      $region10: #{tpu_custom_call.1} parent=5 // pred_check_branch
        %157 = sbr.rel (%p154) target = $region12
      $region11: #{tpu_custom_call.1} parent=5 // pred_region
        %s158 = ssub.s32 %s15, 1
        // Predicated region
        $region13: #{tpu_custom_call.1} parent=11 // pred_check
          %p159 = pneg %p88
        $region14: #{tpu_custom_call.1} parent=11 // pred_check_branch
          %161 = sbr.rel (%p159) target = $region16
        $region15: #{tpu_custom_call.1} parent=11 // pred_region
          %p162 = scmp.lt.s32.totalorder %s27, 0
          %s163 = scalar_select %p162, %s27, 0
          %s164 = smul.addr %s163, 4
          %s165 = scalar_lea.vmem %s1, %s164
        $region16: #{tpu_custom_call.1} parent=11 // pred_fallthru
          _
        // Predicated region
        $region17: #{tpu_custom_call.1} parent=11 // pred_check
          %p166 = pneg %p114
        $region18: #{tpu_custom_call.1} parent=11 // pred_check_branch
          %168 = sbr.rel (%p166) target = $region20
        $region19: #{tpu_custom_call.1} parent=11 // pred_region
          %p169 = scmp.lt.s32.totalorder %s27, 0
          %s170 = scalar_select %p169, %s27, 0
          %s171 = smul.addr %s170, 4
          %s172 = scalar_lea.vmem %s2, %s171
        $region20: #{tpu_custom_call.1} parent=11 // pred_fallthru
          _
      $region12: #{tpu_custom_call.1} parent=5 // pred_fallthru
        _
      %p173 = scmp.lt.s32.totalorder %s15, 2
      // Predicated region
      $region21: #{tpu_custom_call.1} parent=5 // pred_check
        %p174 = pneg %p173
      $region22: #{tpu_custom_call.1} parent=5 // pred_check_branch
        %176 = sbr.rel (%p174) target = $region24
      $region23: #{tpu_custom_call.1} parent=5 // pred_region
        // Predicated region
        $region25: #{tpu_custom_call.1} parent=23 // pred_check
          %p177 = pneg %p56
        $region26: #{tpu_custom_call.1} parent=23 // pred_check_branch
          %179 = sbr.rel (%p177) target = $region28
        $region27: #{tpu_custom_call.1} parent=23 // pred_region
          %s180 = sand.u32 %s46, 1
          %s181 = scalar_lea.sflag [#allocation3], %s180
          %s182 = sand.u32 %s46, 1
          %s183 = smul.addr %s182, 8
          %s184 = scalar_lea.vmem [#allocation2], %s183
          %s185 = smul.u32 2, %s23
          %s187 = ssub.s32 128, 128
          %188 = vsyncadd %s181, %s187
          %s189 = smul.addr %s22, 2
          %s190 = sadd.s32 %s185, %s189
          %s191 = smul.addr %s190, 64
          %s192 = scalar_lea.hbm %s0, %s191
          %s194 = sshll.u32 %s184, 4
          %s195 = int_to_ptr.vmem [resolvable:$true] %s194
          %197 = dma.hbm_to_vmem [thread:$0]  %s192, 128, %s195, %s181
        $region28: #{tpu_custom_call.1} parent=23 // pred_fallthru
          _
      $region24: #{tpu_custom_call.1} parent=5 // pred_fallthru
        _
      %p198 = scmp.le.s32.totalorder 1, %s15
      %p199 = scmp.lt.s32.totalorder %s15, 3
      %p200 = pnand %p198, %p199
      %p201 = pneg %p200
      // Predicated region
      $region29: #{tpu_custom_call.1} parent=5 // pred_check
        _
      $region30: #{tpu_custom_call.1} parent=5 // pred_check_branch
        %203 = sbr.rel (%p200) target = $region32
      $region31: #{tpu_custom_call.1} parent=5 // pred_region
        %s204 = ssub.s32 %s15, 1
        %s205 = sand.u32 %s49, 1
        %s206 = scalar_lea.sflag [#allocation3], %s205
        %s207 = sand.u32 %s49, 1
        %s208 = smul.addr %s207, 8
        %s209 = scalar_lea.vmem [#allocation2], %s208
        // Predicated region
        $region33: #{tpu_custom_call.1} parent=31 // pred_check
          %p210 = pneg %p62
        $region34: #{tpu_custom_call.1} parent=31 // pred_check_branch
          %212 = sbr.rel (%p210) target = $region36
        $region35: #{tpu_custom_call.1} parent=31 // pred_region
          %213 = dma.done %s206, 128
        $region36: #{tpu_custom_call.1} parent=31 // pred_fallthru
          _
        %s214 = sand.u32 %s49, 1
        %s215 = scalar_lea.sflag [#allocation3], %s214
        %s216 = sand.u32 %s49, 1
        %s217 = smul.addr %s216, 8
        %s218 = scalar_lea.vmem [#allocation2], %s217
        %p219 = pneg %p62
        %p220 = pneg %p59
        %p221 = scmp.lt.s32.totalorder %s27, 0
        %s222 = scalar_select %p221, %s27, 0
        %s223 = smul.addr %s222, 4
        %s224 = scalar_lea.vmem %s1, %s223
        %p225 = pneg %p88
        %p226 = pneg %p85
        %p227 = scmp.lt.s32.totalorder %s27, 0
        %s228 = scalar_select %p227, %s27, 0
        %s229 = smul.addr %s228, 4
        %s230 = scalar_lea.vmem %s2, %s229
        %p231 = pneg %p114
        %p232 = pneg %p111
        %p233 = pneg %p144
        %p234 = pneg %p141
        %s235 = sand.u32 %s131, 1
        %s236 = scalar_lea.sflag [#allocation4], %s235
        %s237 = sand.u32 %s131, 1
        %s238 = smul.addr %s237, 8
        %s239 = scalar_lea.vmem [#allocation5], %s238
        %s240 = smul.u32 2, %s26
        %p241 = scmp.lt.s32.totalorder %s27, 0
        %s242 = scalar_select %p241, %s27, 0
        %s243 = smul.addr %s242, 4
        %s244 = scalar_lea.vmem %s1, %s243
        %p245 = scmp.lt.s32.totalorder %s27, 0
        %s246 = scalar_select %p245, %s27, 0
        %s247 = smul.addr %s246, 4
        %s248 = scalar_lea.vmem %s2, %s247
        %s249 = smul.u32 2, %s26
        %v250 = vld [vmem:[%s209] sm:$0xff]
        %v251 = vld [vmem:[%s244] sm:$0xf]
        %v252 = vld [vmem:[%s248] sm:$0xf]
        %254 = vset.pattern.permute.xlu0 0
        %255 = vperm.xlu0 %254, %v252
        %v256 = vpop.permute.xlu0 %255
        %v259 = vcombine.high %v250, %v250
        %vm260 = vcmask 31744
        %v262 = vsel %vm260, %v251, 0
        %vm264 = vcmask 1043456
        %v265 = vsel %vm264, %v250, 0
        %v267 = vsel %vm264, %v259, 0
        %269 = vmatprep.subr.mxu0 0.0
        %270 = vmatpush1.msra.mxu0 0.0
        %271 = vmatprep.subr.mxu0 0.0
        %272 = vmatpush1.msra.mxu0 0.0
        %273 = vmatprep.subr.mxu0 0.0
        %274 = vmatpush1.msra.mxu0 0.0
        %275 = vmatprep.subr.mxu0 0.0
        %276 = vmatpush1.msra.mxu0 0.0
        %277 = vmatprep.subr.mxu0 0.0
        %278 = vmatpush1.msra.mxu0 0.0
        %279 = vmatprep.subr.mxu0 0.0
        %280 = vmatpush1.msra.mxu0 0.0
        %281 = vmatprep.subr.mxu0 0.0
        %282 = vmatpush1.msra.mxu0 0.0
        %283 = vmatprep.subr.mxu0 0.0
        %284 = vmatpush1.msra.mxu0 0.0
        %285 = vmatprep.subr.mxu0 0.0
        %286 = vmatpush1.msra.mxu0 0.0
        %287 = vmatprep.subr.mxu0 0.0
        %288 = vmatpush1.msra.mxu0 0.0
        %289 = vmatprep.subr.mxu0 0.0
        %290 = vmatpush1.msra.mxu0 0.0
        %291 = vmatprep.subr.mxu0 0.0
        %292 = vmatpush1.msra.mxu0 0.0
        %293 = vmatprep.subr.mxu0 0.0
        %294 = vmatpush1.msra.mxu0 0.0
        %295 = vmatprep.subr.mxu0 0.0
        %296 = vmatpush1.msra.mxu0 0.0
        %297 = vmatprep.subr.mxu0 0.0
        %298 = vmatpush1.msra.mxu0 0.0
        %299 = vmatprep.subr.mxu0 %v267
        %300 = vmatpush1.msra.mxu0 %v265
        %301 = vmatprep.subr.mxu0 0.0
        %302 = vmatpush2.msra.mxu0 0.0
        %303 = vmatprep.subr.mxu0 0.0
        %304 = vmatpush2.msra.mxu0 0.0
        %305 = vmatprep.subr.mxu0 0.0
        %306 = vmatpush2.msra.mxu0 0.0
        %307 = vmatprep.subr.mxu0 0.0
        %308 = vmatpush2.msra.mxu0 0.0
        %309 = vmatprep.subr.mxu0 0.0
        %310 = vmatpush2.msra.mxu0 0.0
        %311 = vmatprep.subr.mxu0 0.0
        %312 = vmatpush2.msra.mxu0 0.0
        %313 = vmatprep.subr.mxu0 0.0
        %314 = vmatpush2.msra.mxu0 0.0
        %315 = vmatprep.subr.mxu0 0.0
        %316 = vmatpush2.msra.mxu0 0.0
        %317 = vmatprep.subr.mxu0 0.0
        %318 = vmatpush2.msra.mxu0 0.0
        %319 = vmatprep.subr.mxu0 0.0
        %320 = vmatpush2.msra.mxu0 0.0
        %321 = vmatprep.subr.mxu0 0.0
        %322 = vmatpush2.msra.mxu0 0.0
        %323 = vmatprep.subr.mxu0 0.0
        %324 = vmatpush2.msra.mxu0 0.0
        %325 = vmatprep.subr.mxu0 0.0
        %326 = vmatpush2.msra.mxu0 0.0
        %327 = vmatprep.subr.mxu0 0.0
        %328 = vmatpush2.msra.mxu0 0.0
        %329 = vmatprep.subr.mxu0 0.0
        %330 = vmatpush2.msra.mxu0 0.0
        %331 = vmatprep.subr.mxu0 0.0
        %332 = vmatpush2.msra.mxu0 0.0
        %333 = vmatprep.mubr.f32.mxu0 0.0
        %334 = vmatmul.mubr.f32.gmra.mxu0 %v262
        %v335 = vpop.f32.mrf.mxu0
        %v336 = vadd.f32 %v256, %v335
        %v337 = vpop.f32.mrf.mxu0
        %v338 = vadd.f32 %v256, %v337
        %339 = vdwg.mxu0
        %v340 = vxor.u32 %v336, 2147483648
        %v341 = vxor.u32 %v338, 2147483648
        %v342 = vmul.f32 %v340, 1.442695
        %v343 = vpow.pop %v342
        %v344 = vmul.f32 %v341, 1.442695
        %v345 = vpow.pop %v344
        %v346 = vadd.f32 %v343, 1.0
        %v347 = vadd.f32 %v345, 1.0
        %v348 = vrcp.pop %v346
        %v349 = vmul.f32 1.0, %v348
        %v350 = vrcp.pop %v347
        %v351 = vmul.f32 1.0, %v350
        %v354 = vcombine.low %v349, %v351
        %v356 = vmul.f32 %v250, %v354
        %357 = vst [vmem:[%s239] sm:$0xff] %v356
        %s358 = sand.u32 %s131, 1
        %s359 = scalar_lea.sflag [#allocation4], %s358
        %s360 = sand.u32 %s131, 1
        %s361 = smul.addr %s360, 8
        %s362 = scalar_lea.vmem [#allocation5], %s361
        // Predicated region
        $region37: #{tpu_custom_call.1} parent=31 // pred_check
          %p363 = pneg %p141
        $region38: #{tpu_custom_call.1} parent=31 // pred_check_branch
          %365 = sbr.rel (%p363) target = $region40
        $region39: #{tpu_custom_call.1} parent=31 // pred_region
          %s366 = smul.u32 2, %s26
          %s368 = ssub.s32 128, 128
          %369 = vsyncadd %s359, %s368
          %s370 = smul.addr %s27, 2
          %s371 = sadd.s32 %s366, %s370
          %s372 = smul.addr %s25, 2
          %s373 = sadd.s32 %s371, %s372
          %s374 = smul.addr %s373, 64
          %s375 = scalar_lea.hbm %s3, %s374
          %s377 = sshll.u32 %s362, 4
          %s378 = int_to_ptr.vmem [resolvable:$true] %s377
          %380 = dma.vmem_to_hbm [thread:$0]  %s378, 128, %s375, %s359
        $region40: #{tpu_custom_call.1} parent=31 // pred_fallthru
          _
      $region32: #{tpu_custom_call.1} parent=5 // pred_fallthru
        _
      %p381 = scmp.le.s32.totalorder 2, %s15
      // Predicated region
      $region41: #{tpu_custom_call.1} parent=5 // pred_check
        %p382 = pneg %p381
      $region42: #{tpu_custom_call.1} parent=5 // pred_check_branch
        %384 = sbr.rel (%p382) target = $region44
      $region43: #{tpu_custom_call.1} parent=5 // pred_region
        %s385 = ssub.s32 %s15, 2
        // Predicated region
        $region45: #{tpu_custom_call.1} parent=43 // pred_check
          %p386 = pneg %p147
        $region46: #{tpu_custom_call.1} parent=43 // pred_check_branch
          %388 = sbr.rel (%p386) target = $region48
        $region47: #{tpu_custom_call.1} parent=43 // pred_region
          %s389 = sand.u32 %s132, 1
          %s390 = scalar_lea.sflag [#allocation4], %s389
          %s391 = sand.u32 %s132, 1
          %s392 = smul.addr %s391, 8
          %s393 = scalar_lea.vmem [#allocation5], %s392
          %394 = dma.done %s390, 128
        $region48: #{tpu_custom_call.1} parent=43 // pred_fallthru
          _
      $region44: #{tpu_custom_call.1} parent=5 // pred_fallthru
        _
    $region6: #{tpu_custom_call.1} parent=1 // loop_footer
      %s19 = sadd.s32 1, %s15
    $region7: #{tpu_custom_call.1} parent=1 // loop_footer_branch
      %14 = sbr.rel target = $region3
    $region8: #{tpu_custom_call.1} parent=1 // loop_exit
      _
    %395 = vsyncpa [#allocation3], 1
    %s396 = scalar_lea.sflag [#allocation3], 1
    %397 = vsyncpa %s396, 1
    %398 = vsyncpa [#allocation4], 1
    %s399 = scalar_lea.sflag [#allocation4], 1
    %400 = vsyncpa %s399, 1

</llo_original>
